<compile_context>
chip_gen: v7x
topology: tpu7x:2x2x1
jax: 0.10.0
libtpu: 0.0.40
codegen_flags: <defaults>
</compile_context>

<pallas_src>
import jax
import jax.numpy as jnp
from jax import lax
from jax.experimental import pallas as pl
from jax.experimental.pallas import tpu as pltpu


def _factor_kernel(cm_ref, mf_ref):
    """(1, k, k) causality map -> (1, k, 1) normalized multiplicative factors."""
    cm = cm_ref[0]                        # (k, k)
    cmt = cm.T                            # (k, k), XLU transpose
    k = cm.shape[0]

    row = lax.broadcasted_iota(jnp.int32, (k, k), 0)
    col = lax.broadcasted_iota(jnp.int32, (k, k), 1)
    upper = col > row                     # strictly upper  (torch.triu(., 1))
    lower = col < row                     # strictly lower  (torch.tril(., -1))

    zero = jnp.zeros_like(cm)
    triu = jnp.where(upper, cm, zero)     # triu(cm, 1)
    tril = jnp.where(lower, cm, zero)     # tril(cm, -1)
    triu_t = jnp.where(lower, cmt, zero)  # triu(cm, 1).T
    tril_t = jnp.where(upper, cmt, zero)  # tril(cm, -1).T

    ste = lambda v: (v > 0.0).astype(jnp.float32)   # StraightThroughEstimator fwd

    # PyTorch: e = STE(tril.T - triu) then permuted back -> STE(tril - triu.T)
    #          f = STE(triu - tril.T)
    bool_matrix = ste(tril - triu_t) + ste(triu - tril_t)      # (k, k)

    by_col = jnp.sum(bool_matrix, axis=1, keepdims=True)       # torch dim=2 (row sums)
    # torch dim=1 == column sums: one XLU transpose + lane reduce (no 2nd STE set)
    by_row = jnp.sum(bool_matrix.T, axis=1, keepdims=True)

    mf = jnp.maximum(by_col - by_row, 0.0)                     # ReLU, (k, 1)
    mx = jnp.max(mf, axis=0, keepdims=True)                    # (1, 1)
    mn = jnp.min(mf, axis=0, keepdims=True)                    # (1, 1)
    mf = (mf - mn) / (mx - mn + 1e-8)

    mf_ref[...] = mf[None, :, :]                               # (1, k, 1)


def _scale_kernel(mf_ref, x_ref, o_ref):
    # (tm, tl) * (tm, 1): sublane-broadcast multiply; pure mem-bound.
    o_ref[...] = (x_ref[...] * mf_ref[...]).astype(o_ref.dtype)


def causality_factors_extractor(x, causality_maps):
    """x: (bs, k, h, w), causality_maps: (bs, k, k). Returns causally-weighted x."""
    bs, k, h, w = x.shape
    hw = h * w
    rows = bs * k
    cm = causality_maps.astype(jnp.float32)

    # ---- 1. per-batch multiplicative factors (tiny, runs once per batch) ----
    mf = pl.pallas_call(
        _factor_kernel,
        out_shape=jax.ShapeDtypeStruct((bs, k, 1), jnp.float32),
        grid_spec=pltpu.PrefetchScalarGridSpec(
            num_scalar_prefetch=0,
            grid=(bs,),
            in_specs=[pl.BlockSpec((1, k, k), lambda b: (b, 0, 0))],
            out_specs=pl.BlockSpec((1, k, 1), lambda b: (b, 0, 0)),
        ),
        compiler_params=pltpu.CompilerParams(
            dimension_semantics=("parallel",)),
    )(cm)
    mf2 = mf.reshape(rows, 1)

    # ---- 2. broadcast-scale: the mem-bound part, lane-dense tiling ----------
    x2 = x.reshape(rows, hw)
    # <=256 sublanes x <=2048 lanes of f32 = <=2 MiB per block: double-buffered
    # in+out fits every generation's scoped VMEM (v7x 64 MiB physical) while
    # staying past the ~512-lane roofline sweet spot on v5e/v6e.
    tm = rows if rows < 256 else 256          # full dim or multiple of 8
    tl = hw if hw < 2048 else 2048            # full dim or multiple of 128
    grid = (pl.cdiv(rows, tm), pl.cdiv(hw, tl))
    itemsize = jnp.dtype(x2.dtype).itemsize
    cost = pl.CostEstimate(
        flops=rows * hw,
        transcendentals=0,
        bytes_accessed=2 * rows * hw * itemsize + rows * 4,
    )

    out2 = pl.pallas_call(
        _scale_kernel,
        out_shape=jax.ShapeDtypeStruct((rows, hw), x2.dtype),
        grid_spec=pltpu.PrefetchScalarGridSpec(
            num_scalar_prefetch=0,
            grid=grid,
            in_specs=[
                pl.BlockSpec((tm, 1), lambda i, j: (i, 0)),
                pl.BlockSpec((tm, tl), lambda i, j: (i, j)),
            ],
            out_specs=pl.BlockSpec((tm, tl), lambda i, j: (i, j)),
        ),
        compiler_params=pltpu.CompilerParams(
            dimension_semantics=("parallel", "parallel")),
        cost_estimate=cost,
    )(mf2, x2)
    # TODO(synk): if the caller never reuses x afterwards, add
    # input_output_aliases={1: 0} to write the scaled result in place and save
    # one bs*k*hw HBM allocation (left off here because the demo reuses x).
    return out2.reshape(bs, k, h, w)


def _reference(x, cm):
    """Pure-JAX transcription of the PyTorch forward for verification."""
    triu = jnp.triu(cm, 1)
    tril = jnp.transpose(jnp.tril(cm, -1), (0, 2, 1))
    e = (tril - triu > 0).astype(jnp.float32)
    e = jnp.transpose(e, (0, 2, 1))
    f = (triu - tril > 0).astype(jnp.float32)
    bm = e + f
    by_col = jnp.sum(bm, axis=2)
    by_row = jnp.sum(bm, axis=1)
    mf = jax.nn.relu(by_col - by_row)
    mx = jnp.max(mf, axis=1, keepdims=True)
    mn = jnp.min(mf, axis=1, keepdims=True)
    mf = (mf - mn) / (mx - mn + 1e-8)
    return jnp.einsum('bkmn,bk->bkmn', x, mf)


if __name__ == "__main__":
    key = jax.random.PRNGKey(0)
    kx, kc = jax.random.split(key)
    bs, k, h, w = 2, 4, 16, 16
    x = jax.random.normal(kx, (bs, k, h, w), dtype=jnp.float32)
    causality_maps = jax.random.normal(kc, (bs, k, k), dtype=jnp.float32)

    out = causality_factors_extractor(x, causality_maps)
    out = jax.block_until_ready(out)

    ref = _reference(x, causality_maps)
    assert out.shape == (bs, k, h, w)
    if not jnp.allclose(out, ref, atol=1e-5, rtol=1e-5):
        raise AssertionError("Pallas kernel does not match reference")
    print("KERNEL_OK")
</pallas_src>

<mosaic_0001>
module attributes {stable_mosaic.version = 11 : i64} {
  func.func @_factor_kernel(%arg0: i32, %arg1: memref<1x4x4xf32, #tpu.memory_space<vmem>>, %arg2: memref<1x4x1xf32, #tpu.memory_space<vmem>>) attributes {dimension_semantics = [#tpu.dimension_semantics<parallel>], iteration_bounds = array<i64: 2>, scalar_prefetch = 0 : i64, scratch_operands = 0 : i64, tpu.core_type = #tpu.core_type<tc>, window_params = [{transform_indices = @transform_0, window_bounds = array<i64: 1, 4, 4>}, {transform_indices = @transform_1, window_bounds = array<i64: 1, 4, 1>}]} {
    %c0 = arith.constant 0 : index
    %c0_0 = arith.constant 0 : index
    %c0_1 = arith.constant 0 : index
    %0 = vector.load %arg1[%c0, %c0_0, %c0_1] : memref<1x4x4xf32, #tpu.memory_space<vmem>>, vector<1x4x4xf32>
    %1 = vector.shape_cast %0 : vector<1x4x4xf32> to vector<4x4xf32>
    %2 = tpu.transpose %1, [1, 0] : vector<4x4xf32> -> vector<4x4xf32>
    %3 = tpu.iota {dimensions = array<i32: 0>} : vector<4x4xi32>
    %4 = tpu.iota {dimensions = array<i32: 1>} : vector<4x4xi32>
    %5 = arith.cmpi sgt, %4, %3 : vector<4x4xi32>
    %6 = arith.cmpi slt, %4, %3 : vector<4x4xi32>
    %cst = arith.constant 0.000000e+00 : f32
    %7 = vector.broadcast %cst : f32 to vector<4x4xf32>
    %8 = arith.select %5, %1, %7 : vector<4x4xi1>, vector<4x4xf32>
    %9 = arith.select %6, %1, %7 : vector<4x4xi1>, vector<4x4xf32>
    %10 = arith.select %6, %2, %7 : vector<4x4xi1>, vector<4x4xf32>
    %11 = arith.select %5, %2, %7 : vector<4x4xi1>, vector<4x4xf32>
    %12 = arith.subf %9, %10 : vector<4x4xf32>
    %cst_2 = arith.constant 0.000000e+00 : f32
    %13 = vector.broadcast %cst_2 : f32 to vector<4x4xf32>
    %14 = arith.cmpf ogt, %12, %13 : vector<4x4xf32>
    %15 = arith.extui %14 : vector<4x4xi1> to vector<4x4xi32>
    %16 = arith.sitofp %15 : vector<4x4xi32> to vector<4x4xf32>
    %17 = arith.subf %8, %11 : vector<4x4xf32>
    %cst_3 = arith.constant 0.000000e+00 : f32
    %18 = vector.broadcast %cst_3 : f32 to vector<4x4xf32>
    %19 = arith.cmpf ogt, %17, %18 : vector<4x4xf32>
    %20 = arith.extui %19 : vector<4x4xi1> to vector<4x4xi32>
    %21 = arith.sitofp %20 : vector<4x4xi32> to vector<4x4xf32>
    %22 = arith.addf %16, %21 : vector<4x4xf32>
    %cst_4 = arith.constant dense<0.000000e+00> : vector<4xf32>
    %23 = vector.multi_reduction <add>, %22, %cst_4 [1] : vector<4x4xf32> to vector<4xf32>
    %24 = vector.shape_cast %23 : vector<4xf32> to vector<4x1xf32>
    %25 = tpu.transpose %22, [1, 0] : vector<4x4xf32> -> vector<4x4xf32>
    %cst_5 = arith.constant dense<0.000000e+00> : vector<4xf32>
    %26 = vector.multi_reduction <add>, %25, %cst_5 [1] : vector<4x4xf32> to vector<4xf32>
    %27 = vector.shape_cast %26 : vector<4xf32> to vector<4x1xf32>
    %28 = arith.subf %24, %27 : vector<4x1xf32>
    %cst_6 = arith.constant 0.000000e+00 : f32
    %29 = vector.broadcast %cst_6 : f32 to vector<4x1xf32>
    %30 = arith.maximumf %28, %29 : vector<4x1xf32>
    %cst_7 = arith.constant dense<0xFF800000> : vector<1xf32>
    %31 = vector.multi_reduction <maximumf>, %30, %cst_7 [0] : vector<4x1xf32> to vector<1xf32>
    %32 = vector.shape_cast %31 : vector<1xf32> to vector<1x1xf32>
    %cst_8 = arith.constant dense<0x7F800000> : vector<1xf32>
    %33 = vector.multi_reduction <minimumf>, %30, %cst_8 [0] : vector<4x1xf32> to vector<1xf32>
    %34 = vector.shape_cast %33 : vector<1xf32> to vector<1x1xf32>
    %35 = vector.broadcast %34 : vector<1x1xf32> to vector<4x1xf32>
    %36 = arith.subf %30, %35 : vector<4x1xf32>
    %37 = arith.subf %32, %34 : vector<1x1xf32>
    %cst_9 = arith.constant 9.99999993E-9 : f32
    %38 = vector.broadcast %cst_9 : f32 to vector<1x1xf32>
    %39 = arith.addf %37, %38 : vector<1x1xf32>
    %40 = vector.broadcast %39 : vector<1x1xf32> to vector<4x1xf32>
    %41 = arith.divf %36, %40 : vector<4x1xf32>
    %42 = vector.shape_cast %41 : vector<4x1xf32> to vector<1x4x1xf32>
    %c0_10 = arith.constant 0 : index
    %c0_11 = arith.constant 0 : index
    %c0_12 = arith.constant 0 : index
    %43 = vector.load %arg2[%c0_10, %c0_11, %c0_12] : memref<1x4x1xf32, #tpu.memory_space<vmem>>, vector<1x4x1xf32>
    tpu.vector_store %arg2[%c0_10, %c0_11, %c0_12], %42 {strides = array<i32>} : memref<1x4x1xf32, #tpu.memory_space<vmem>>, vector<1x4x1xf32>,
    return
  }
  func.func @transform_0(%arg0: i32) -> (i32, i32, i32) {
    %c0_i32 = arith.constant 0 : i32
    %c0_i32_0 = arith.constant 0 : i32
    %c0_i32_1 = arith.constant 0 : i32
    return %arg0, %c0_i32, %c0_i32_0 : i32, i32, i32
  }
  func.func @transform_1(%arg0: i32) -> (i32, i32, i32) {
    %c0_i32 = arith.constant 0 : i32
    %c0_i32_0 = arith.constant 0 : i32
    %c0_i32_1 = arith.constant 0 : i32
    return %arg0, %c0_i32, %c0_i32_0 : i32, i32, i32
  }
}

</mosaic_0001>

<llo_original>
// kernel: tpu_custom_call.1
$region0: #{tpu_custom_call.1}
  #allocation0 [shape = 'u32[]', space=smem, size = 0x4, offset = 0x4, fixed_abs, tag = 'smem constant byte address 0x4 - core index']
  #allocation1 [shape = 'u32[144,128]{1,0:T(1,128)}', space=vmem, size = 0x12000, scoped, tag = 'internal scratch']
  %s0 = inlined_call_operand.hbm [shape: f32[2,4,4], index: 0, kind: input, shape index: {}]
  %s1 = inlined_call_operand.vmem [shape: f32[2,4,1], index: 1, kind: output, shape index: {}]
  %s2 = sld [smem:[#allocation0]]
  $region41: #{tpu_custom_call.1} parent=0
    _
  %s4 = ssub.s32 1, %s2
  %s5 = scalar_select 0, %s4, %s2
  $region1: #{tpu_custom_call.1} parent=0
    #allocation2 [shape = 'u8[4096]{0}', space=vmem, size = 0x1000, scoped, tag = 'input window, operand 0']
    #allocation3 [shape = 's32[2]{0}', space=sflag, size = 0x8, scoped, tag = 'scoped memory for tpu_custom_call.1']
    %6 = vsyncpa [#allocation3], 0
    %s7 = scalar_lea.sflag [#allocation3], 1
    %8 = vsyncpa %s7, 0
    loop: start=0, step=1, limit=4
    $region2: #{tpu_custom_call.1} parent=1 // loop_pre_header
      _
    $region3: #{tpu_custom_call.1} parent=1 // loop_header
      %s10 = sphi 0, %s14
      %p11 = scmp.ge.s32.totalorder %s10, 4
      %s20 = sphi 0, %s22
      %s23 = sphi 0, %s20
      %s24 = sphi 0, %s23
      %s40 = sphi 0, %s24
      %s46 = sphi 0, %s48
      %s49 = sphi 0, %s46
      %s50 = sphi 0, %s49
      %s66 = sphi 0, %s50
    $region4: #{tpu_custom_call.1} parent=1 // loop_header_branch
      %13 = sbr.rel (%p11) target = $region8
    $region5: #{tpu_custom_call.1} parent=1 // loop_body
      %s15 = ssub.s32 %s10, 1
      %s16 = ssub.s32 %s10, 2
      %s17 = sadd.s32 %s10, 1
      %s18 = ssub.s32 %s10, %s17
      %p19 = scmp.eq.s32.totalorder %s18, 0
      %s21 = sadd.s32 %s20, 1
      %s22 = scalar_select %p19, %s20, %s21
      %p25 = pneg %p19
      %p26 = scmp.eq.s32.totalorder %s10, 1
      %p27 = por %p25, %p26
      %p28 = scmp.ne.s32.totalorder %s20, %s23
      %p29 = scmp.eq.s32.totalorder %s10, 0
      %p30 = por %p28, %p29
      %p31 = scmp.ne.s32.totalorder %s20, %s23
      %p32 = scmp.eq.s32.totalorder %s15, 1
      %p33 = por %p31, %p32
      %p34 = scmp.ne.s32.totalorder %s23, %s24
      %p35 = scmp.eq.s32.totalorder %s15, 0
      %p36 = por %p34, %p35
      %p37 = scmp.ne.s32.totalorder %s23, %s24
      %p38 = scmp.eq.s32.totalorder %s16, 1
      %p39 = por %p37, %p38
      %p41 = scmp.ne.s32.totalorder %s24, %s40
      %p42 = scmp.eq.s32.totalorder %s16, 0
      %p43 = por %p41, %p42
      %s44 = ssub.s32 %s10, %s17
      %p45 = scmp.eq.s32.totalorder %s44, 0
      %s47 = sadd.s32 %s46, 1
      %s48 = scalar_select %p45, %s46, %s47
      %p51 = pneg %p45
      %p52 = scmp.eq.s32.totalorder %s10, 1
      %p53 = por %p51, %p52
      %p54 = scmp.ne.s32.totalorder %s46, %s49
      %p55 = scmp.eq.s32.totalorder %s10, 0
      %p56 = por %p54, %p55
      %p57 = scmp.ne.s32.totalorder %s46, %s49
      %p58 = scmp.eq.s32.totalorder %s15, 1
      %p59 = por %p57, %p58
      %p60 = scmp.ne.s32.totalorder %s49, %s50
      %p61 = scmp.eq.s32.totalorder %s15, 0
      %p62 = por %p60, %p61
      %p63 = scmp.ne.s32.totalorder %s49, %s50
      %p64 = scmp.eq.s32.totalorder %s16, 1
      %p65 = por %p63, %p64
      %p67 = scmp.ne.s32.totalorder %s50, %s66
      %p68 = scmp.eq.s32.totalorder %s16, 0
      %p69 = por %p67, %p68
      %p70 = scmp.le.s32.totalorder 1, %s10
      %p71 = scmp.lt.s32.totalorder %s10, 3
      %p72 = pnand %p70, %p71
      %p73 = pneg %p72
      // Predicated region
      $region9: #{tpu_custom_call.1} parent=5 // pred_check
        _
      $region10: #{tpu_custom_call.1} parent=5 // pred_check_branch
        %75 = sbr.rel (%p72) target = $region12
      $region11: #{tpu_custom_call.1} parent=5 // pred_region
        %s76 = ssub.s32 %s10, 1
      $region12: #{tpu_custom_call.1} parent=5 // pred_fallthru
        _
      %p77 = scmp.lt.s32.totalorder %s10, 2
      // Predicated region
      $region13: #{tpu_custom_call.1} parent=5 // pred_check
        %p78 = pneg %p77
      $region14: #{tpu_custom_call.1} parent=5 // pred_check_branch
        %80 = sbr.rel (%p78) target = $region16
      $region15: #{tpu_custom_call.1} parent=5 // pred_region
        // Predicated region
        $region17: #{tpu_custom_call.1} parent=15 // pred_check
          %p81 = pneg %p30
        $region18: #{tpu_custom_call.1} parent=15 // pred_check_branch
          %83 = sbr.rel (%p81) target = $region20
        $region19: #{tpu_custom_call.1} parent=15 // pred_region
          %s84 = sand.u32 %s20, 1
          %s85 = scalar_lea.sflag [#allocation3], %s84
          %s86 = sand.u32 %s20, 1
          %s87 = smul.addr %s86, 4
          %s88 = scalar_lea.vmem [#allocation2], %s87
          %s90 = ssub.s32 64, 64
          %91 = vsyncadd %s85, %s90
          %s92 = smul.addr %s10, 64
          %s93 = scalar_lea.hbm %s0, %s92
          %s95 = sshll.u32 %s88, 4
          %s96 = int_to_ptr.vmem [resolvable:$true] %s95
          %98 = dma.hbm_to_vmem [thread:$0]  %s93, 64, %s96, %s85
        $region20: #{tpu_custom_call.1} parent=15 // pred_fallthru
          _
      $region16: #{tpu_custom_call.1} parent=5 // pred_fallthru
        _
      %p99 = scmp.le.s32.totalorder 1, %s10
      %p100 = scmp.lt.s32.totalorder %s10, 3
      %p101 = pnand %p99, %p100
      %p102 = pneg %p101
      // Predicated region
      $region21: #{tpu_custom_call.1} parent=5 // pred_check
        _
      $region22: #{tpu_custom_call.1} parent=5 // pred_check_branch
        %104 = sbr.rel (%p101) target = $region24
      $region23: #{tpu_custom_call.1} parent=5 // pred_region
        %s105 = ssub.s32 %s10, 1
        %s106 = sand.u32 %s23, 1
        %s107 = scalar_lea.sflag [#allocation3], %s106
        %s108 = sand.u32 %s23, 1
        %s109 = smul.addr %s108, 4
        %s110 = scalar_lea.vmem [#allocation2], %s109
        // Predicated region
        $region25: #{tpu_custom_call.1} parent=23 // pred_check
          %p111 = pneg %p36
        $region26: #{tpu_custom_call.1} parent=23 // pred_check_branch
          %113 = sbr.rel (%p111) target = $region28
        $region27: #{tpu_custom_call.1} parent=23 // pred_region
          %114 = dma.done %s107, 64
        $region28: #{tpu_custom_call.1} parent=23 // pred_fallthru
          _
        %s115 = sand.u32 %s23, 1
        %s116 = scalar_lea.sflag [#allocation3], %s115
        %s117 = sand.u32 %s23, 1
        %s118 = smul.addr %s117, 4
        %s119 = scalar_lea.vmem [#allocation2], %s118
        %p120 = pneg %p36
        %p121 = pneg %p33
        %p122 = pneg %p62
        %p123 = pneg %p59
        %p124 = scmp.lt.s32.totalorder %s15, 1
        %s125 = scalar_select %p124, %s15, 1
        %s126 = smul.addr %s125, 4
        %s127 = scalar_lea.vmem %s1, %s126
        %p128 = scmp.lt.s32.totalorder %s15, 1
        %s129 = scalar_select %p128, %s15, 1
        %s130 = smul.addr %s129, 4
        %s131 = scalar_lea.vmem %s1, %s130
        %v132 = vld [vmem:[%s110] sm:$0xf]
        %133 = vxpose.xlu0.b32.start [1/16] %v132, 128
        %134 = vxpose.xlu0.b32.cont [2/16] 0.0, 128
        %135 = vxpose.xlu0.b32.cont [3/16] 0.0, 128
        %136 = vxpose.xlu0.b32.cont [4/16] 0.0, 128
        %137 = vxpose.xlu0.b32.cont [5/16] 0.0, 128
        %138 = vxpose.xlu0.b32.cont [6/16] 0.0, 128
        %139 = vxpose.xlu0.b32.cont [7/16] 0.0, 128
        %140 = vxpose.xlu0.b32.cont [8/16] 0.0, 128
        %141 = vxpose.xlu0.b32.cont [9/16] 0.0, 128
        %142 = vxpose.xlu0.b32.cont [10/16] 0.0, 128
        %143 = vxpose.xlu0.b32.cont [11/16] 0.0, 128
        %144 = vxpose.xlu0.b32.cont [12/16] 0.0, 128
        %145 = vxpose.xlu0.b32.cont [13/16] 0.0, 128
        %146 = vxpose.xlu0.b32.cont [14/16] 0.0, 128
        %147 = vxpose.xlu0.b32.cont [15/16] 0.0, 128
        %148 = vxpose.xlu0.b32.end [16/16] 0.0, 128
        %v149 = vpop.trf.xlu0
        %v150 = vpop.trf.xlu0
        %v151 = vpop.trf.xlu0
        %v152 = vpop.trf.xlu0
        %v153 = vpop.trf.xlu0
        %v154 = vpop.trf.xlu0
        %v155 = vpop.trf.xlu0
        %v156 = vpop.trf.xlu0
        %v157 = vpop.trf.xlu0
        %v158 = vpop.trf.xlu0
        %v159 = vpop.trf.xlu0
        %v160 = vpop.trf.xlu0
        %v161 = vpop.trf.xlu0
        %v162 = vpop.trf.xlu0
        %v163 = vpop.trf.xlu0
        %v164 = vpop.trf.xlu0
        %v165 = vlaneseq
        %v166 = vshrl.u32 %v165, 7
        %v167 = vlaneseq
        %v168 = vand.u32 %v167, 127
        %vm169 = vcmp.gt.s32.totalorder %v168, %v166
        %vm170 = vcmp.lt.s32.totalorder %v168, %v166
        %v171 = vsel %vm169, %v132, 0.0
        %v172 = vsel %vm170, %v132, 0.0
        %v173 = vsel %vm170, %v149, 0.0
        %v174 = vsel %vm169, %v149, 0.0
        %v175 = vsub.f32 %v172, %v173
        %vm176 = vcmp.gt.f32.partialorder %v175, 0.0
        %v177 = vsel %vm176, 1, 0
        %v178 = vcvt.s32.f32 %v177
        %v179 = vsub.f32 %v171, %v174
        %vm180 = vcmp.gt.f32.partialorder %v179, 0.0
        %v181 = vsel %vm180, 1, 0
        %v182 = vcvt.s32.f32 %v181
        %v183 = vadd.f32 %v178, %v182
        %vm184 = vcmask 27648
        %v185 = vsel %vm184, %v183, 0.0
        %186 = vadd.xlane.f32.xlu0 %v185
        %v187 = vpop.xlane.xlu0 %186
        %188 = vxpose.xlu0.b32.start [1/16] %v183, 128
        %189 = vxpose.xlu0.b32.cont [2/16] 0.0, 128
        %190 = vxpose.xlu0.b32.cont [3/16] 0.0, 128
        %191 = vxpose.xlu0.b32.cont [4/16] 0.0, 128
        %192 = vxpose.xlu0.b32.cont [5/16] 0.0, 128
        %193 = vxpose.xlu0.b32.cont [6/16] 0.0, 128
        %194 = vxpose.xlu0.b32.cont [7/16] 0.0, 128
        %195 = vxpose.xlu0.b32.cont [8/16] 0.0, 128
        %196 = vxpose.xlu0.b32.cont [9/16] 0.0, 128
        %197 = vxpose.xlu0.b32.cont [10/16] 0.0, 128
        %198 = vxpose.xlu0.b32.cont [11/16] 0.0, 128
        %199 = vxpose.xlu0.b32.cont [12/16] 0.0, 128
        %200 = vxpose.xlu0.b32.cont [13/16] 0.0, 128
        %201 = vxpose.xlu0.b32.cont [14/16] 0.0, 128
        %202 = vxpose.xlu0.b32.cont [15/16] 0.0, 128
        %203 = vxpose.xlu0.b32.end [16/16] 0.0, 128
        %v204 = vpop.trf.xlu0
        %v205 = vpop.trf.xlu0
        %v206 = vpop.trf.xlu0
        %v207 = vpop.trf.xlu0
        %v208 = vpop.trf.xlu0
        %v209 = vpop.trf.xlu0
        %v210 = vpop.trf.xlu0
        %v211 = vpop.trf.xlu0
        %v212 = vpop.trf.xlu0
        %v213 = vpop.trf.xlu0
        %v214 = vpop.trf.xlu0
        %v215 = vpop.trf.xlu0
        %v216 = vpop.trf.xlu0
        %v217 = vpop.trf.xlu0
        %v218 = vpop.trf.xlu0
        %v219 = vpop.trf.xlu0
        %v220 = vsel %vm184, %v204, 0.0
        %221 = vadd.xlane.f32.xlu0 %v220
        %v222 = vpop.xlane.xlu0 %221
        %v223 = vsub.f32 %v187, %v222
        %v224 = vmax.f32 %v223, 0.0
        %vm225 = vcmask 1043456
        %v226 = vsel %vm225, %v224, -inf
        %v227 = vrot.slane %v226, 4
        %v228 = vmax.f32 %v226, %v227
        %v229 = vrot.slane %v228, 2
        %v230 = vmax.f32 %v228, %v229
        %v231 = vrot.slane %v230, 1
        %v232 = vmax.f32 %v230, %v231
        %v233 = vsel %vm225, %v224, inf
        %v234 = vrot.slane %v233, 4
        %v235 = vmin.f32 %v233, %v234
        %v236 = vrot.slane %v235, 2
        %v237 = vmin.f32 %v235, %v236
        %v238 = vrot.slane %v237, 1
        %v239 = vmin.f32 %v237, %v238
        %v240 = vsub.f32 %v224, %v239
        %v241 = vsub.f32 %v232, %v239
        %v242 = vadd.f32 %v241, 1e-08
        %v243 = vrcp.pop %v242
        %v244 = vmul.f32 %v240, %v243
        %vm245 = vcmask 3072
        %246 = vst.msk [vmem:[%s131] sm:$0xf] %vm245, %v244
        %p247 = scmp.lt.s32.totalorder %s15, 1
        %s248 = scalar_select %p247, %s15, 1
        %s249 = smul.addr %s248, 4
        %s250 = scalar_lea.vmem %s1, %s249
        // Predicated region
        $region29: #{tpu_custom_call.1} parent=23 // pred_check
          %p251 = pneg %p59
        $region30: #{tpu_custom_call.1} parent=23 // pred_check_branch
          %253 = sbr.rel (%p251) target = $region32
        $region31: #{tpu_custom_call.1} parent=23 // pred_region
          _
        $region32: #{tpu_custom_call.1} parent=23 // pred_fallthru
          _
      $region24: #{tpu_custom_call.1} parent=5 // pred_fallthru
        _
      %p254 = scmp.le.s32.totalorder 2, %s10
      // Predicated region
      $region33: #{tpu_custom_call.1} parent=5 // pred_check
        %p255 = pneg %p254
      $region34: #{tpu_custom_call.1} parent=5 // pred_check_branch
        %257 = sbr.rel (%p255) target = $region36
      $region35: #{tpu_custom_call.1} parent=5 // pred_region
        %s258 = ssub.s32 %s10, 2
        // Predicated region
        $region37: #{tpu_custom_call.1} parent=35 // pred_check
          %p259 = pneg %p65
        $region38: #{tpu_custom_call.1} parent=35 // pred_check_branch
          %261 = sbr.rel (%p259) target = $region40
        $region39: #{tpu_custom_call.1} parent=35 // pred_region
          %p262 = scmp.lt.s32.totalorder %s16, 1
          %s263 = scalar_select %p262, %s16, 1
          %s264 = smul.addr %s263, 4
          %s265 = scalar_lea.vmem %s1, %s264
        $region40: #{tpu_custom_call.1} parent=35 // pred_fallthru
          _
      $region36: #{tpu_custom_call.1} parent=5 // pred_fallthru
        _
    $region6: #{tpu_custom_call.1} parent=1 // loop_footer
      %s14 = sadd.s32 1, %s10
    $region7: #{tpu_custom_call.1} parent=1 // loop_footer_branch
      %9 = sbr.rel target = $region3
    $region8: #{tpu_custom_call.1} parent=1 // loop_exit
      _
    %266 = vsyncpa [#allocation3], 1
    %s267 = scalar_lea.sflag [#allocation3], 1
    %268 = vsyncpa %s267, 1

</llo_original>
